<compile_context>
chip_gen: v7x
topology: tpu7x:2x2x1
jax: 0.10.0
libtpu: 0.0.40
codegen_flags: <defaults>
</compile_context>

<pallas_src>
import jax
import jax.numpy as jnp
from jax.experimental import pallas as pl
from jax.experimental.pallas import tpu as pltpu


def _swish_kernel(x_ref, beta_ref, o_ref):
    x = x_ref[...]          # (tb, th)
    beta = beta_ref[...]    # (1, th) -> broadcasts over rows
    z = beta * x
    # sigmoid(z) == 0.5 * (tanh(0.5 * z) + 1): exactly one EUP op (tanh) per
    # element, instead of exp + divide (which can cost 2 EUP-class ops plus
    # VALU Newton steps). Keeps the kernel memory-bound on v7x; neutral on
    # v5e/v6e where HBM leaves ample EUP slack.
    o_ref[...] = x * (0.5 * jnp.tanh(0.5 * z) + 0.5)


def swish(x, beta, *, target_block_bytes=8 * 1024 * 1024):
    """x: (B, H) f32, beta: (1, H) f32 -> x * sigmoid(beta * x), shape (B, H)."""
    B, H = x.shape
    assert beta.shape == (1, H), f"beta must be (1, {H}), got {beta.shape}"
    bytes_per_elem = x.dtype.itemsize

    # --- Lane-dense padding: keep the output last dim a multiple of 128 so
    # stores lower to unmasked vst (biggest measured lever for elementwise).
    H_pad = ((H + 127) // 128) * 128
    if H_pad != H:
        x = jnp.pad(x, ((0, 0), (0, H_pad - H)))
        beta = jnp.pad(beta, ((0, 0), (0, H_pad - H)))

    # --- Tile sizes.
    # Lane tile: full row up to 2048 lanes (H_pad is already a multiple of 128).
    th = min(H_pad, 2048)

    # Sublane tile: adaptive so a block is ~target_block_bytes regardless of H.
    if B <= 8:
        tb = B  # full extent satisfies the block-shape rule for tiny batches
    else:
        tb = target_block_bytes // (th * bytes_per_elem)
        tb = max(8, (tb // 8) * 8)        # multiple of 8 (sublane granularity)
        if tb >= B:
            tb = B                        # full extent; also always legal

    n_b = pl.cdiv(B, tb)
    n_h = pl.cdiv(H_pad, th)

    # v7x has 2 TensorCores: avoid a degenerate (1, 1) grid when the batch is
    # large enough to split, so both cores (and their DMA issue slots) get work.
    if n_b == 1 and n_h == 1 and B >= 16:
        tb = max(8, (B // 2 // 8) * 8)
        n_b = pl.cdiv(B, tb)

    # --- Scoped VMEM limit: double-buffered x + out blocks, a resident beta
    # row, plus slack — but never the full physical VMEM (v7x has only 64 MiB).
    try:
        vmem_cap = pltpu.get_tpu_info().vmem_capacity_bytes
    except Exception:
        vmem_cap = 64 * 1024 * 1024
    block_bytes = tb * th * bytes_per_elem
    vmem_needed = 4 * block_bytes + 2 * th * bytes_per_elem + (2 << 20)
    vmem_limit = max(16 << 20, min(int(vmem_cap * 3 // 4), vmem_needed))

    # Grid is (H blocks, B blocks): with H on the OUTER axis, beta's block
    # index is constant across every inner batch step, so Pallas keeps the
    # beta row resident instead of re-DMAing it each step.
    grid = (n_h, n_b)

    out = pl.pallas_call(
        _swish_kernel,
        out_shape=jax.ShapeDtypeStruct((B, H_pad), x.dtype),
        grid_spec=pltpu.PrefetchScalarGridSpec(
            num_scalar_prefetch=0,
            grid=grid,
            in_specs=[
                pl.BlockSpec((tb, th), lambda j, i: (i, j)),   # x tile
                pl.BlockSpec((1, th), lambda j, i: (0, j)),    # beta row (resident per H tile)
            ],
            out_specs=pl.BlockSpec((tb, th), lambda j, i: (i, j)),
        ),
        compiler_params=pltpu.CompilerParams(
            # Both grid axes are fully independent -> shard across the two
            # TensorCores on v7x (no-op on single-TC v5e/v6e).
            dimension_semantics=("parallel", "parallel"),
            vmem_limit_bytes=vmem_limit,
        ),
    )(x, beta)

    if H_pad != H:
        out = out[:, :H]
    return out


if __name__ == "__main__":
    key = jax.random.PRNGKey(0)

    # Small shapes consistent with the module: (batch, n_hidden).
    B, H = 16, 256
    x = jax.random.normal(key, (B, H), dtype=jnp.float32)

    # Deterministic parameter init matching torch.full((1, n_hidden), 1.0).
    beta = jnp.full((1, H), 1.0, dtype=jnp.float32)

    out = jax.block_until_ready(swish(x, beta))

    # Pure-JAX reference.
    ref = x * jax.nn.sigmoid(beta * x)
    assert out.shape == (B, H)
    assert jnp.allclose(out, ref, atol=1e-5, rtol=1e-5)

    print("KERNEL_OK")
</pallas_src>

<mosaic_0001>
module attributes {stable_mosaic.version = 11 : i64} {
  func.func @_swish_kernel(%arg0: i32, %arg1: i32, %arg2: memref<8x256xf32, #tpu.memory_space<vmem>>, %arg3: memref<1x256xf32, #tpu.memory_space<vmem>>, %arg4: memref<8x256xf32, #tpu.memory_space<vmem>>) attributes {dimension_semantics = [#tpu.dimension_semantics<parallel>, #tpu.dimension_semantics<parallel>], iteration_bounds = array<i64: 1, 2>, scalar_prefetch = 0 : i64, scratch_operands = 0 : i64, tpu.core_type = #tpu.core_type<tc>, window_params = [{transform_indices = @transform_0, window_bounds = array<i64: 8, 256>}, {transform_indices = @transform_1, window_bounds = array<i64: 1, 256>}, {transform_indices = @transform_2, window_bounds = array<i64: 8, 256>}]} {
    %c0 = arith.constant 0 : index
    %c0_0 = arith.constant 0 : index
    %0 = vector.load %arg2[%c0, %c0_0] : memref<8x256xf32, #tpu.memory_space<vmem>>, vector<8x256xf32>
    %c0_1 = arith.constant 0 : index
    %c0_2 = arith.constant 0 : index
    %1 = vector.load %arg3[%c0_1, %c0_2] : memref<1x256xf32, #tpu.memory_space<vmem>>, vector<1x256xf32>
    %2 = vector.broadcast %1 : vector<1x256xf32> to vector<8x256xf32>
    %3 = arith.mulf %2, %0 : vector<8x256xf32>
    %cst = arith.constant 5.000000e-01 : f32
    %4 = vector.broadcast %cst : f32 to vector<8x256xf32>
    %5 = arith.mulf %4, %3 : vector<8x256xf32>
    %6 = math.tanh %5 : vector<8x256xf32>
    %cst_3 = arith.constant 5.000000e-01 : f32
    %7 = vector.broadcast %cst_3 : f32 to vector<8x256xf32>
    %8 = arith.mulf %7, %6 : vector<8x256xf32>
    %cst_4 = arith.constant 5.000000e-01 : f32
    %9 = vector.broadcast %cst_4 : f32 to vector<8x256xf32>
    %10 = arith.addf %8, %9 : vector<8x256xf32>
    %11 = arith.mulf %0, %10 : vector<8x256xf32>
    %c0_5 = arith.constant 0 : index
    %c0_6 = arith.constant 0 : index
    %12 = vector.load %arg4[%c0_5, %c0_6] : memref<8x256xf32, #tpu.memory_space<vmem>>, vector<8x256xf32>
    tpu.vector_store %arg4[%c0_5, %c0_6], %11 {strides = array<i32>} : memref<8x256xf32, #tpu.memory_space<vmem>>, vector<8x256xf32>,
    return
  }
  func.func @transform_0(%arg0: i32, %arg1: i32) -> (i32, i32) {
    %c0_i32 = arith.constant 0 : i32
    return %arg1, %arg0 : i32, i32
  }
  func.func @transform_1(%arg0: i32, %arg1: i32) -> (i32, i32) {
    %c0_i32 = arith.constant 0 : i32
    %c0_i32_0 = arith.constant 0 : i32
    return %c0_i32, %arg0 : i32, i32
  }
  func.func @transform_2(%arg0: i32, %arg1: i32) -> (i32, i32) {
    %c0_i32 = arith.constant 0 : i32
    return %arg1, %arg0 : i32, i32
  }
}

</mosaic_0001>

<llo_original>
// kernel: tpu_custom_call.1
$region0: #{tpu_custom_call.1}
  #allocation0 [shape = 'u32[]', space=smem, size = 0x4, offset = 0x4, fixed_abs, tag = 'smem constant byte address 0x4 - core index']
  #allocation1 [shape = 'u32[144,128]{1,0:T(1,128)}', space=vmem, size = 0x12000, scoped, tag = 'internal scratch']
  %s0 = inlined_call_operand.hbm [shape: f32[16,256], index: 0, kind: input, shape index: {}]
  %s1 = inlined_call_operand.vmem [shape: f32[1,256], index: 1, kind: input, shape index: {}]
  %s2 = inlined_call_operand.hbm [shape: f32[16,256], index: 2, kind: output, shape index: {}]
  %s3 = sld [smem:[#allocation0]]
  $region45: #{tpu_custom_call.1} parent=0
    _
  %s5 = ssub.s32 1, %s3
  %s6 = scalar_select 0, %s5, %s3
  $region1: #{tpu_custom_call.1} parent=0
    #allocation2 [shape = 'u8[16384]{0}', space=vmem, size = 0x4000, scoped, tag = 'input window, operand 0']
    #allocation3 [shape = 's32[2]{0}', space=sflag, size = 0x8, scoped, tag = 'scoped memory for tpu_custom_call.1']
    #allocation4 [shape = 's32[2]{0}', space=sflag, size = 0x8, scoped, tag = 'scoped memory for tpu_custom_call.1']
    #allocation5 [shape = 'u8[16384]{0}', space=vmem, size = 0x4000, scoped, tag = 'output window, operand 0']
    %7 = vsyncpa [#allocation3], 0
    %s8 = scalar_lea.sflag [#allocation3], 1
    %9 = vsyncpa %s8, 0
    %10 = vsyncpa [#allocation4], 0
    %s11 = scalar_lea.sflag [#allocation4], 1
    %12 = vsyncpa %s11, 0
    loop: start=0, step=1, limit=4
    $region2: #{tpu_custom_call.1} parent=1 // loop_pre_header
      _
    $region3: #{tpu_custom_call.1} parent=1 // loop_header
      %s14 = sphi 0, %s18
      %p15 = scmp.ge.s32.totalorder %s14, 4
      %s21 = sphi 0, %s33
      %s22 = sphi 0, %s29
      %s23 = sphi 0, %s21
      %s24 = sphi 0, %s22
      %s25 = sphi 0, %s23
      %s26 = sphi 0, %s24
      %s38 = sphi 0, %s40
      %s41 = sphi 0, %s38
      %s42 = sphi 0, %s41
      %s58 = sphi 0, %s42
      %s64 = sphi 0, %s66
      %s67 = sphi 0, %s64
      %s68 = sphi 0, %s67
      %s84 = sphi 0, %s68
      %s92 = sphi 0, %s94
      %s95 = sphi 0, %s92
      %s96 = sphi 0, %s95
      %s112 = sphi 0, %s96
    $region4: #{tpu_custom_call.1} parent=1 // loop_header_branch
      %17 = sbr.rel (%p15) target = $region8
    $region5: #{tpu_custom_call.1} parent=1 // loop_body
      %s19 = ssub.s32 %s14, 1
      %s20 = ssub.s32 %s14, 2
      %s27 = sadd.s32 1, %s22
      %p28 = scmp.ge.s32.totalorder %s27, 2
      %s29 = scalar_select %p28, 0, %s27
      %s30 = sadd.s32 1, %s21
      %s31 = scalar_select %p28, %s30, %s21
      %p32 = scmp.ge.s32.totalorder %s31, 1
      %s33 = scalar_select %p32, 0, %s31
      %s34 = ssub.s32 %s22, %s29
      %s35 = ssub.s32 %s21, %s33
      %s36 = sor.u32 %s34, %s35
      %p37 = scmp.eq.s32.totalorder %s36, 0
      %s39 = sadd.s32 %s38, 1
      %s40 = scalar_select %p37, %s38, %s39
      %p43 = pneg %p37
      %p44 = scmp.eq.s32.totalorder %s14, 1
      %p45 = por %p43, %p44
      %p46 = scmp.ne.s32.totalorder %s38, %s41
      %p47 = scmp.eq.s32.totalorder %s14, 0
      %p48 = por %p46, %p47
      %p49 = scmp.ne.s32.totalorder %s38, %s41
      %p50 = scmp.eq.s32.totalorder %s19, 1
      %p51 = por %p49, %p50
      %p52 = scmp.ne.s32.totalorder %s41, %s42
      %p53 = scmp.eq.s32.totalorder %s19, 0
      %p54 = por %p52, %p53
      %p55 = scmp.ne.s32.totalorder %s41, %s42
      %p56 = scmp.eq.s32.totalorder %s20, 1
      %p57 = por %p55, %p56
      %p59 = scmp.ne.s32.totalorder %s42, %s58
      %p60 = scmp.eq.s32.totalorder %s20, 0
      %p61 = por %p59, %p60
      %s62 = ssub.s32 %s21, %s33
      %p63 = scmp.eq.s32.totalorder %s62, 0
      %s65 = sadd.s32 %s64, 1
      %s66 = scalar_select %p63, %s64, %s65
      %p69 = pneg %p63
      %p70 = scmp.eq.s32.totalorder %s14, 1
      %p71 = por %p69, %p70
      %p72 = scmp.ne.s32.totalorder %s64, %s67
      %p73 = scmp.eq.s32.totalorder %s14, 0
      %p74 = por %p72, %p73
      %p75 = scmp.ne.s32.totalorder %s64, %s67
      %p76 = scmp.eq.s32.totalorder %s19, 1
      %p77 = por %p75, %p76
      %p78 = scmp.ne.s32.totalorder %s67, %s68
      %p79 = scmp.eq.s32.totalorder %s19, 0
      %p80 = por %p78, %p79
      %p81 = scmp.ne.s32.totalorder %s67, %s68
      %p82 = scmp.eq.s32.totalorder %s20, 1
      %p83 = por %p81, %p82
      %p85 = scmp.ne.s32.totalorder %s68, %s84
      %p86 = scmp.eq.s32.totalorder %s20, 0
      %p87 = por %p85, %p86
      %s88 = ssub.s32 %s22, %s29
      %s89 = ssub.s32 %s21, %s33
      %s90 = sor.u32 %s88, %s89
      %p91 = scmp.eq.s32.totalorder %s90, 0
      %s93 = sadd.s32 %s92, 1
      %s94 = scalar_select %p91, %s92, %s93
      %p97 = pneg %p91
      %p98 = scmp.eq.s32.totalorder %s14, 1
      %p99 = por %p97, %p98
      %p100 = scmp.ne.s32.totalorder %s92, %s95
      %p101 = scmp.eq.s32.totalorder %s14, 0
      %p102 = por %p100, %p101
      %p103 = scmp.ne.s32.totalorder %s92, %s95
      %p104 = scmp.eq.s32.totalorder %s19, 1
      %p105 = por %p103, %p104
      %p106 = scmp.ne.s32.totalorder %s95, %s96
      %p107 = scmp.eq.s32.totalorder %s19, 0
      %p108 = por %p106, %p107
      %p109 = scmp.ne.s32.totalorder %s95, %s96
      %p110 = scmp.eq.s32.totalorder %s20, 1
      %p111 = por %p109, %p110
      %p113 = scmp.ne.s32.totalorder %s96, %s112
      %p114 = scmp.eq.s32.totalorder %s20, 0
      %p115 = por %p113, %p114
      %p116 = scmp.le.s32.totalorder 1, %s14
      %p117 = scmp.lt.s32.totalorder %s14, 3
      %p118 = pnand %p116, %p117
      %p119 = pneg %p118
      // Predicated region
      $region9: #{tpu_custom_call.1} parent=5 // pred_check
        _
      $region10: #{tpu_custom_call.1} parent=5 // pred_check_branch
        %121 = sbr.rel (%p118) target = $region12
      $region11: #{tpu_custom_call.1} parent=5 // pred_region
        %s122 = ssub.s32 %s14, 1
        // Predicated region
        $region13: #{tpu_custom_call.1} parent=11 // pred_check
          %p123 = pneg %p80
        $region14: #{tpu_custom_call.1} parent=11 // pred_check_branch
          %125 = sbr.rel (%p123) target = $region16
        $region15: #{tpu_custom_call.1} parent=11 // pred_region
          %s126 = smul.u32 2, %s23
          %p127 = scmp.lt.s32.totalorder %s126, 1
          %s128 = scalar_select %p127, %s126, 1
          %s129 = scalar_lea.vmem %s1, %s128
          %s130 = smul.u32 2, %s23
        $region16: #{tpu_custom_call.1} parent=11 // pred_fallthru
          _
      $region12: #{tpu_custom_call.1} parent=5 // pred_fallthru
        _
      %p131 = scmp.lt.s32.totalorder %s14, 2
      // Predicated region
      $region17: #{tpu_custom_call.1} parent=5 // pred_check
        %p132 = pneg %p131
      $region18: #{tpu_custom_call.1} parent=5 // pred_check_branch
        %134 = sbr.rel (%p132) target = $region20
      $region19: #{tpu_custom_call.1} parent=5 // pred_region
        // Predicated region
        $region21: #{tpu_custom_call.1} parent=19 // pred_check
          %p135 = pneg %p48
        $region22: #{tpu_custom_call.1} parent=19 // pred_check_branch
          %137 = sbr.rel (%p135) target = $region24
        $region23: #{tpu_custom_call.1} parent=19 // pred_region
          %s138 = sand.u32 %s38, 1
          %s139 = scalar_lea.sflag [#allocation3], %s138
          %s140 = sand.u32 %s38, 1
          %s141 = smul.addr %s140, 16
          %s142 = scalar_lea.vmem [#allocation2], %s141
          %s143 = smul.u32 2, %s21
          %s145 = ssub.s32 256, 256
          %146 = vsyncadd %s139, %s145
          %s147 = smul.addr %s22, 2
          %s148 = sadd.s32 %s143, %s147
          %s149 = smul.addr %s148, 128
          %s150 = scalar_lea.hbm %s0, %s149
          %s152 = sshll.u32 %s142, 4
          %s153 = int_to_ptr.vmem [resolvable:$true] %s152
          %155 = dma.hbm_to_vmem [thread:$0]  %s150, 256, %s153, %s139
        $region24: #{tpu_custom_call.1} parent=19 // pred_fallthru
          _
      $region20: #{tpu_custom_call.1} parent=5 // pred_fallthru
        _
      %p156 = scmp.le.s32.totalorder 1, %s14
      %p157 = scmp.lt.s32.totalorder %s14, 3
      %p158 = pnand %p156, %p157
      %p159 = pneg %p158
      // Predicated region
      $region25: #{tpu_custom_call.1} parent=5 // pred_check
        _
      $region26: #{tpu_custom_call.1} parent=5 // pred_check_branch
        %161 = sbr.rel (%p158) target = $region28
      $region27: #{tpu_custom_call.1} parent=5 // pred_region
        %s162 = ssub.s32 %s14, 1
        %s163 = sand.u32 %s41, 1
        %s164 = scalar_lea.sflag [#allocation3], %s163
        %s165 = sand.u32 %s41, 1
        %s166 = smul.addr %s165, 16
        %s167 = scalar_lea.vmem [#allocation2], %s166
        // Predicated region
        $region29: #{tpu_custom_call.1} parent=27 // pred_check
          %p168 = pneg %p54
        $region30: #{tpu_custom_call.1} parent=27 // pred_check_branch
          %170 = sbr.rel (%p168) target = $region32
        $region31: #{tpu_custom_call.1} parent=27 // pred_region
          %171 = dma.done %s164, 256
        $region32: #{tpu_custom_call.1} parent=27 // pred_fallthru
          _
        %s172 = sand.u32 %s41, 1
        %s173 = scalar_lea.sflag [#allocation3], %s172
        %s174 = sand.u32 %s41, 1
        %s175 = smul.addr %s174, 16
        %s176 = scalar_lea.vmem [#allocation2], %s175
        %p177 = pneg %p54
        %p178 = pneg %p51
        %s179 = smul.u32 2, %s23
        %p180 = scmp.lt.s32.totalorder %s179, 1
        %s181 = scalar_select %p180, %s179, 1
        %s182 = scalar_lea.vmem %s1, %s181
        %p183 = pneg %p80
        %p184 = pneg %p77
        %p185 = pneg %p108
        %p186 = pneg %p105
        %s187 = sand.u32 %s95, 1
        %s188 = scalar_lea.sflag [#allocation4], %s187
        %s189 = sand.u32 %s95, 1
        %s190 = smul.addr %s189, 16
        %s191 = scalar_lea.vmem [#allocation5], %s190
        %s192 = smul.u32 2, %s23
        %s193 = smul.u32 2, %s23
        %p194 = scmp.lt.s32.totalorder %s193, 1
        %s195 = scalar_select %p194, %s193, 1
        %s196 = scalar_lea.vmem %s1, %s195
        %s197 = smul.u32 2, %s23
        %s198 = smul.u32 2, %s23
        %v199 = vld [vmem:[%s167] sm:$0xff]
        %v200 = vld [vmem:[%s167 + $0x8] sm:$0xff]
        %v201 = vld [vmem:[%s196] sm:$0x3]
        %v203 = vlaneseq
        %v204 = vshrl.u32 %v203, 7
        %v205 = vsub.s32 0, %v204
        %v206 = vrot.slane %v201, %v205
        %v207 = vlaneseq
        %v208 = vshrl.u32 %v207, 7
        %v209 = vsub.s32 1, %v208
        %v210 = vrot.slane %v201, %v209
        %v213 = vmul.f32 %v206, %v199
        %v214 = vmul.f32 %v210, %v200
        %v215 = vmul.f32 %v213, 0.5
        %v216 = vmul.f32 %v214, 0.5
        %v217 = vtanh.pop %v215
        %v218 = vtanh.pop %v216
        %v219 = vmul.f32 %v217, 0.5
        %v220 = vmul.f32 %v218, 0.5
        %v221 = vadd.f32 %v219, 0.5
        %v222 = vadd.f32 %v220, 0.5
        %v223 = vmul.f32 %v199, %v221
        %v224 = vmul.f32 %v200, %v222
        %225 = vst [vmem:[%s191] sm:$0xff] %v223
        %226 = vst [vmem:[%s191 + $0x8] sm:$0xff] %v224
        %s227 = sand.u32 %s95, 1
        %s228 = scalar_lea.sflag [#allocation4], %s227
        %s229 = sand.u32 %s95, 1
        %s230 = smul.addr %s229, 16
        %s231 = scalar_lea.vmem [#allocation5], %s230
        // Predicated region
        $region33: #{tpu_custom_call.1} parent=27 // pred_check
          %p232 = pneg %p105
        $region34: #{tpu_custom_call.1} parent=27 // pred_check_branch
          %234 = sbr.rel (%p232) target = $region36
        $region35: #{tpu_custom_call.1} parent=27 // pred_region
          %s235 = smul.u32 2, %s23
          %s237 = ssub.s32 256, 256
          %238 = vsyncadd %s228, %s237
          %s239 = smul.addr %s24, 2
          %s240 = sadd.s32 %s235, %s239
          %s241 = smul.addr %s240, 128
          %s242 = scalar_lea.hbm %s2, %s241
          %s244 = sshll.u32 %s231, 4
          %s245 = int_to_ptr.vmem [resolvable:$true] %s244
          %247 = dma.vmem_to_hbm [thread:$0]  %s245, 256, %s242, %s228
        $region36: #{tpu_custom_call.1} parent=27 // pred_fallthru
          _
      $region28: #{tpu_custom_call.1} parent=5 // pred_fallthru
        _
      %p248 = scmp.le.s32.totalorder 2, %s14
      // Predicated region
      $region37: #{tpu_custom_call.1} parent=5 // pred_check
        %p249 = pneg %p248
      $region38: #{tpu_custom_call.1} parent=5 // pred_check_branch
        %251 = sbr.rel (%p249) target = $region40
      $region39: #{tpu_custom_call.1} parent=5 // pred_region
        %s252 = ssub.s32 %s14, 2
        // Predicated region
        $region41: #{tpu_custom_call.1} parent=39 // pred_check
          %p253 = pneg %p111
        $region42: #{tpu_custom_call.1} parent=39 // pred_check_branch
          %255 = sbr.rel (%p253) target = $region44
        $region43: #{tpu_custom_call.1} parent=39 // pred_region
          %s256 = sand.u32 %s96, 1
          %s257 = scalar_lea.sflag [#allocation4], %s256
          %s258 = sand.u32 %s96, 1
          %s259 = smul.addr %s258, 16
          %s260 = scalar_lea.vmem [#allocation5], %s259
          %261 = dma.done %s257, 256
        $region44: #{tpu_custom_call.1} parent=39 // pred_fallthru
          _
      $region40: #{tpu_custom_call.1} parent=5 // pred_fallthru
        _
    $region6: #{tpu_custom_call.1} parent=1 // loop_footer
      %s18 = sadd.s32 1, %s14
    $region7: #{tpu_custom_call.1} parent=1 // loop_footer_branch
      %13 = sbr.rel target = $region3
    $region8: #{tpu_custom_call.1} parent=1 // loop_exit
      _
    %262 = vsyncpa [#allocation3], 1
    %s263 = scalar_lea.sflag [#allocation3], 1
    %264 = vsyncpa %s263, 1
    %265 = vsyncpa [#allocation4], 1
    %s266 = scalar_lea.sflag [#allocation4], 1
    %267 = vsyncpa %s266, 1

</llo_original>
